<compile_context>
chip_gen: v7x
topology: tpu7x:2x2x1
jax: 0.10.0
libtpu: 0.0.40
codegen_flags: <defaults>
</compile_context>

<pallas_src>
import jax
import jax.numpy as jnp
import numpy as np
from jax.experimental import pallas as pl
from jax.experimental.pallas import tpu as pltpu

HIDDEN = 128
LANE = 128


def dqn_kernel(x_ref, w1_ref, b1_ref, w2_ref, b2_ref, w3_ref, b3_ref, out_ref):
    x = x_ref[...]                      # (tm, n_in)   f32
    w1 = w1_ref[...]                    # (n_in, 128)  f32
    n_in = x.shape[1]

    # ---- fc1 + ReLU on the VPU (tiny K; avoid a degenerate MXU pass) ----
    acc = x[:, 0:1] * w1[0:1, :]
    for k in range(1, n_in):            # static, tiny trip count (n_in = 2)
        acc = acc + x[:, k:k + 1] * w1[k:k + 1, :]
    h1 = jnp.maximum(acc + b1_ref[...], 0.0)

    # ---- fc2 + ReLU: bf16 MXU, f32 accumulation, f32 epilogue ----
    h2 = jnp.dot(h1.astype(jnp.bfloat16), w2_ref[...],
                 preferred_element_type=jnp.float32) + b2_ref[...]
    h2 = jnp.maximum(h2, 0.0)

    # ---- fc3: bf16 MXU into a lane-dense (128-wide) padded output ----
    out_ref[...] = (
        jnp.dot(h2.astype(jnp.bfloat16), w3_ref[...],
                preferred_element_type=jnp.float32) + b3_ref[...]
    ).astype(out_ref.dtype)


def dqn_forward(x, params, *, block_m=128):
    """x: (B, n_inputs) f32.  params: dict with (in, out)-transposed weights."""
    w1, b1 = params["w1"], params["b1"]
    w2, b2 = params["w2"], params["b2"]
    w3, b3 = params["w3"], params["b3"]

    B, n_in = x.shape
    n_out = w3.shape[1]

    # Lane-dense output: pad fc3 to a multiple of 128 output lanes.
    n_out_pad = pl.cdiv(n_out, LANE) * LANE
    w3p = jnp.pad(w3, ((0, 0), (0, n_out_pad - n_out))).astype(jnp.bfloat16)
    b3p = jnp.pad(b3, ((0, 0), (0, n_out_pad - n_out)))

    # bf16 weights for the MXU matmuls; fc1 weight and all biases stay f32.
    w2b = w2.astype(jnp.bfloat16)

    # Batch tile: multiple of 8 sublanes, capped at block_m; pad B up to a multiple.
    tm = max(8, min(block_m, ((B + 7) // 8) * 8))
    tm = ((tm + 7) // 8) * 8
    b_pad = pl.cdiv(B, tm) * tm
    xp = jnp.pad(x, ((0, b_pad - B), (0, 0))) if b_pad != B else x

    grid = (b_pad // tm,)
    # Grid-invariant operands: constant index_map -> DMA'd once, resident in VMEM.
    const = lambda a: pl.BlockSpec(a.shape, lambda i: (0,) * a.ndim)

    out = pl.pallas_call(
        dqn_kernel,
        out_shape=jax.ShapeDtypeStruct((b_pad, n_out_pad), jnp.float32),
        grid=grid,
        in_specs=[
            pl.BlockSpec((tm, n_in), lambda i: (i, 0)),
            const(w1), const(b1), const(w2b), const(b2), const(w3p), const(b3p),
        ],
        out_specs=pl.BlockSpec((tm, n_out_pad), lambda i: (i, 0)),
        compiler_params=pltpu.CompilerParams(
            dimension_semantics=("parallel",)),
    )(xp, w1, b1, w2b, b2, w3p, b3p)

    return out[:B, :n_out]


def init_params(key, n_inputs, n_outputs, hidden=HIDDEN):
    """Deterministic init mimicking PyTorch nn.Linear default U(-1/sqrt(fan_in), +)."""
    ks = jax.random.split(key, 6)

    def linear(kw, kb, fan_in, fan_out):
        bound = 1.0 / np.sqrt(fan_in)
        # stored transposed: (in, out) so the kernel computes y = x @ W + b
        w = jax.random.uniform(kw, (fan_in, fan_out), jnp.float32, -bound, bound)
        b = jax.random.uniform(kb, (1, fan_out), jnp.float32, -bound, bound)
        return w, b

    w1, b1 = linear(ks[0], ks[1], n_inputs, hidden)
    w2, b2 = linear(ks[2], ks[3], hidden, hidden)
    w3, b3 = linear(ks[4], ks[5], hidden, n_outputs)
    return {"w1": w1, "b1": b1, "w2": w2, "b2": b2, "w3": w3, "b3": b3}


def dqn_ref(x, p):
    """Pure-JAX f32 reference (PyTorch forward semantics)."""
    h1 = jnp.maximum(x @ p["w1"] + p["b1"], 0.0)
    h2 = jnp.maximum(h1 @ p["w2"] + p["b2"], 0.0)
    return h2 @ p["w3"] + p["b3"]


if __name__ == "__main__":
    # MountainCar-v0: observation dim = 2, action dim = 3
    n_inputs, n_outputs = 2, 3

    key = jax.random.PRNGKey(0)
    k_x, k_p = jax.random.split(key)
    params = init_params(k_p, n_inputs, n_outputs)

    # Check both the single-tile path (inference-size batch) and the batch grid
    # (replay-buffer-size batch -> 2 grid steps, "parallel" over TensorCores).
    for batch in (8, 256):
        x = jax.random.normal(jax.random.fold_in(k_x, batch),
                              (batch, n_inputs), jnp.float32)
        out = jax.block_until_ready(dqn_forward(x, params))
        ref = dqn_ref(x, params)
        # bf16 MXU path vs. pure-f32 reference -> modest tolerance.
        np.testing.assert_allclose(np.asarray(out), np.asarray(ref),
                                   rtol=2e-2, atol=2e-2)

    print("KERNEL_OK")
</pallas_src>

<mosaic_0001>
module attributes {stable_mosaic.version = 11 : i64} {
  func.func @dqn_kernel(%arg0: i32, %arg1: memref<8x2xf32, #tpu.memory_space<vmem>>, %arg2: memref<2x128xf32, #tpu.memory_space<vmem>>, %arg3: memref<1x128xf32, #tpu.memory_space<vmem>>, %arg4: memref<128x128xbf16, #tpu.memory_space<vmem>>, %arg5: memref<1x128xf32, #tpu.memory_space<vmem>>, %arg6: memref<128x128xbf16, #tpu.memory_space<vmem>>, %arg7: memref<1x128xf32, #tpu.memory_space<vmem>>, %arg8: memref<8x128xf32, #tpu.memory_space<vmem>>) attributes {dimension_semantics = [#tpu.dimension_semantics<parallel>], iteration_bounds = array<i64: 1>, scalar_prefetch = 0 : i64, scratch_operands = 0 : i64, tpu.core_type = #tpu.core_type<tc>, window_params = [{transform_indices = @transform_0, window_bounds = array<i64: 8, 2>}, {pipeline_mode = #tpu.pipeline_mode<synchronous>, transform_indices = @transform_1, window_bounds = array<i64: 2, 128>}, {pipeline_mode = #tpu.pipeline_mode<synchronous>, transform_indices = @transform_2, window_bounds = array<i64: 1, 128>}, {pipeline_mode = #tpu.pipeline_mode<synchronous>, transform_indices = @transform_3, window_bounds = array<i64: 128, 128>}, {pipeline_mode = #tpu.pipeline_mode<synchronous>, transform_indices = @transform_4, window_bounds = array<i64: 1, 128>}, {pipeline_mode = #tpu.pipeline_mode<synchronous>, transform_indices = @transform_5, window_bounds = array<i64: 128, 128>}, {pipeline_mode = #tpu.pipeline_mode<synchronous>, transform_indices = @transform_6, window_bounds = array<i64: 1, 128>}, {transform_indices = @transform_7, window_bounds = array<i64: 8, 128>}]} {
    %c0 = arith.constant 0 : index
    %c0_0 = arith.constant 0 : index
    %0 = vector.load %arg1[%c0, %c0_0] : memref<8x2xf32, #tpu.memory_space<vmem>>, vector<8x2xf32>
    %c0_1 = arith.constant 0 : index
    %c0_2 = arith.constant 0 : index
    %1 = vector.load %arg2[%c0_1, %c0_2] : memref<2x128xf32, #tpu.memory_space<vmem>>, vector<2x128xf32>
    %2 = vector.extract_strided_slice %0 {offsets = [0, 0], sizes = [8, 1], strides = [1, 1]} : vector<8x2xf32> to vector<8x1xf32>
    %3 = vector.extract_strided_slice %1 {offsets = [0, 0], sizes = [1, 128], strides = [1, 1]} : vector<2x128xf32> to vector<1x128xf32>
    %4 = vector.broadcast %2 : vector<8x1xf32> to vector<8x128xf32>
    %5 = vector.broadcast %3 : vector<1x128xf32> to vector<8x128xf32>
    %6 = arith.mulf %4, %5 : vector<8x128xf32>
    %7 = vector.extract_strided_slice %0 {offsets = [0, 1], sizes = [8, 1], strides = [1, 1]} : vector<8x2xf32> to vector<8x1xf32>
    %8 = vector.extract_strided_slice %1 {offsets = [1, 0], sizes = [1, 128], strides = [1, 1]} : vector<2x128xf32> to vector<1x128xf32>
    %9 = vector.broadcast %7 : vector<8x1xf32> to vector<8x128xf32>
    %10 = vector.broadcast %8 : vector<1x128xf32> to vector<8x128xf32>
    %11 = arith.mulf %9, %10 : vector<8x128xf32>
    %12 = arith.addf %6, %11 : vector<8x128xf32>
    %c0_3 = arith.constant 0 : index
    %c0_4 = arith.constant 0 : index
    %13 = vector.load %arg3[%c0_3, %c0_4] : memref<1x128xf32, #tpu.memory_space<vmem>>, vector<1x128xf32>
    %14 = vector.broadcast %13 : vector<1x128xf32> to vector<8x128xf32>
    %15 = arith.addf %12, %14 : vector<8x128xf32>
    %cst = arith.constant 0.000000e+00 : f32
    %16 = vector.broadcast %cst : f32 to vector<8x128xf32>
    %17 = arith.maximumf %15, %16 : vector<8x128xf32>
    %18 = arith.truncf %17 : vector<8x128xf32> to vector<8x128xbf16>
    %c0_5 = arith.constant 0 : index
    %c0_6 = arith.constant 0 : index
    %19 = vector.load %arg4[%c0_5, %c0_6] : memref<128x128xbf16, #tpu.memory_space<vmem>>, vector<128x128xbf16>
    %cst_7 = arith.constant dense<0.000000e+00> : vector<8x128xf32>
    %20 = tpu.matmul %18, %19, %cst_7 {dimension_numbers = #tpu.dot_dimension_numbers<[1], [0], [0], [1], [0, 0, 1, 1], [], []>} : vector<8x128xbf16>, vector<128x128xbf16>, vector<8x128xf32> -> vector<8x128xf32>
    %c0_8 = arith.constant 0 : index
    %c0_9 = arith.constant 0 : index
    %21 = vector.load %arg5[%c0_8, %c0_9] : memref<1x128xf32, #tpu.memory_space<vmem>>, vector<1x128xf32>
    %22 = vector.broadcast %21 : vector<1x128xf32> to vector<8x128xf32>
    %23 = arith.addf %20, %22 : vector<8x128xf32>
    %cst_10 = arith.constant 0.000000e+00 : f32
    %24 = vector.broadcast %cst_10 : f32 to vector<8x128xf32>
    %25 = arith.maximumf %23, %24 : vector<8x128xf32>
    %26 = arith.truncf %25 : vector<8x128xf32> to vector<8x128xbf16>
    %c0_11 = arith.constant 0 : index
    %c0_12 = arith.constant 0 : index
    %27 = vector.load %arg6[%c0_11, %c0_12] : memref<128x128xbf16, #tpu.memory_space<vmem>>, vector<128x128xbf16>
    %cst_13 = arith.constant dense<0.000000e+00> : vector<8x128xf32>
    %28 = tpu.matmul %26, %27, %cst_13 {dimension_numbers = #tpu.dot_dimension_numbers<[1], [0], [0], [1], [0, 0, 1, 1], [], []>} : vector<8x128xbf16>, vector<128x128xbf16>, vector<8x128xf32> -> vector<8x128xf32>
    %c0_14 = arith.constant 0 : index
    %c0_15 = arith.constant 0 : index
    %29 = vector.load %arg7[%c0_14, %c0_15] : memref<1x128xf32, #tpu.memory_space<vmem>>, vector<1x128xf32>
    %30 = vector.broadcast %29 : vector<1x128xf32> to vector<8x128xf32>
    %31 = arith.addf %28, %30 : vector<8x128xf32>
    %c0_16 = arith.constant 0 : index
    %c0_17 = arith.constant 0 : index
    %32 = vector.load %arg8[%c0_16, %c0_17] : memref<8x128xf32, #tpu.memory_space<vmem>>, vector<8x128xf32>
    tpu.vector_store %arg8[%c0_16, %c0_17], %31 {strides = array<i32>} : memref<8x128xf32, #tpu.memory_space<vmem>>, vector<8x128xf32>,
    return
  }
  func.func @transform_0(%arg0: i32) -> (i32, i32) {
    %c0_i32 = arith.constant 0 : i32
    %c0_i32_0 = arith.constant 0 : i32
    return %arg0, %c0_i32 : i32, i32
  }
  func.func @transform_1(%arg0: i32) -> (i32, i32) {
    %c0_i32 = arith.constant 0 : i32
    %c0_i32_0 = arith.constant 0 : i32
    %c0_i32_1 = arith.constant 0 : i32
    return %c0_i32, %c0_i32_0 : i32, i32
  }
  func.func @transform_2(%arg0: i32) -> (i32, i32) {
    %c0_i32 = arith.constant 0 : i32
    %c0_i32_0 = arith.constant 0 : i32
    %c0_i32_1 = arith.constant 0 : i32
    return %c0_i32, %c0_i32_0 : i32, i32
  }
  func.func @transform_3(%arg0: i32) -> (i32, i32) {
    %c0_i32 = arith.constant 0 : i32
    %c0_i32_0 = arith.constant 0 : i32
    %c0_i32_1 = arith.constant 0 : i32
    return %c0_i32, %c0_i32_0 : i32, i32
  }
  func.func @transform_4(%arg0: i32) -> (i32, i32) {
    %c0_i32 = arith.constant 0 : i32
    %c0_i32_0 = arith.constant 0 : i32
    %c0_i32_1 = arith.constant 0 : i32
    return %c0_i32, %c0_i32_0 : i32, i32
  }
  func.func @transform_5(%arg0: i32) -> (i32, i32) {
    %c0_i32 = arith.constant 0 : i32
    %c0_i32_0 = arith.constant 0 : i32
    %c0_i32_1 = arith.constant 0 : i32
    return %c0_i32, %c0_i32_0 : i32, i32
  }
  func.func @transform_6(%arg0: i32) -> (i32, i32) {
    %c0_i32 = arith.constant 0 : i32
    %c0_i32_0 = arith.constant 0 : i32
    %c0_i32_1 = arith.constant 0 : i32
    return %c0_i32, %c0_i32_0 : i32, i32
  }
  func.func @transform_7(%arg0: i32) -> (i32, i32) {
    %c0_i32 = arith.constant 0 : i32
    %c0_i32_0 = arith.constant 0 : i32
    return %arg0, %c0_i32 : i32, i32
  }
}

</mosaic_0001>

<llo_original>
// kernel: tpu_custom_call.1
$region0: #{tpu_custom_call.1}
  #allocation0 [shape = 'u32[]', space=smem, size = 0x4, offset = 0x4, fixed_abs, tag = 'smem constant byte address 0x4 - core index']
  #allocation1 [shape = 'u32[144,128]{1,0:T(1,128)}', space=vmem, size = 0x12000, scoped, tag = 'internal scratch']
  %s0 = inlined_call_operand.vmem [shape: f32[8,2], index: 0, kind: input, shape index: {}]
  %s1 = inlined_call_operand.vmem [shape: f32[2,128], index: 1, kind: input, shape index: {}]
  %s2 = inlined_call_operand.vmem [shape: f32[1,128], index: 2, kind: input, shape index: {}]
  %s3 = inlined_call_operand.hbm [shape: bf16[128,128], index: 3, kind: input, shape index: {}]
  %s4 = inlined_call_operand.vmem [shape: f32[1,128], index: 4, kind: input, shape index: {}]
  %s5 = inlined_call_operand.hbm [shape: bf16[128,128], index: 5, kind: input, shape index: {}]
  %s6 = inlined_call_operand.vmem [shape: f32[1,128], index: 6, kind: input, shape index: {}]
  %s7 = inlined_call_operand.hbm [shape: f32[8,128], index: 7, kind: output, shape index: {}]
  %s8 = sld [smem:[#allocation0]]
  $region46: #{tpu_custom_call.1} parent=0
    _
  %s10 = ssub.s32 1, %s8
  %s11 = scalar_select 0, %s10, %s8
  $region1: #{tpu_custom_call.1} parent=0
    #allocation2 [shape = 'u8[32768]{0}', space=vmem, size = 0x8000, scoped, tag = 'input window, operand 3, single buffered']
    #allocation3 [shape = 's32[1]{0}', space=sflag, size = 0x4, scoped, tag = 'scoped memory for tpu_custom_call.1']
    #allocation4 [shape = 's32[1]{0}', space=sflag, size = 0x4, scoped, tag = 'scoped memory for tpu_custom_call.1']
    #allocation5 [shape = 'u8[32768]{0}', space=vmem, size = 0x8000, scoped, tag = 'input window, operand 5, single buffered']
    #allocation6 [shape = 's32[1]{0}', space=sflag, size = 0x4, scoped, tag = 'scoped memory for tpu_custom_call.1']
    #allocation7 [shape = 'u8[4096]{0}', space=vmem, size = 0x1000, scoped, tag = 'output window, operand 0, single buffered']
    %12 = vsyncpa [#allocation3], 0
    %13 = vsyncpa [#allocation6], 0
    %14 = vsyncpa [#allocation4], 0
    // Predicated region
    $region2: #{tpu_custom_call.1} parent=1 // pred_check
      _
    $region3: #{tpu_custom_call.1} parent=1 // pred_check_branch
      %16 = sbr.rel (0) target = $region5
    $region4: #{tpu_custom_call.1} parent=1 // pred_region
      _
    $region5: #{tpu_custom_call.1} parent=1 // pred_fallthru
      _
    // Predicated region
    $region6: #{tpu_custom_call.1} parent=1 // pred_check
      _
    $region7: #{tpu_custom_call.1} parent=1 // pred_check_branch
      %18 = sbr.rel (0) target = $region9
    $region8: #{tpu_custom_call.1} parent=1 // pred_region
      _
    $region9: #{tpu_custom_call.1} parent=1 // pred_fallthru
      _
    // Predicated region
    $region10: #{tpu_custom_call.1} parent=1 // pred_check
      _
    $region11: #{tpu_custom_call.1} parent=1 // pred_check_branch
      %20 = sbr.rel (0) target = $region13
    $region12: #{tpu_custom_call.1} parent=1 // pred_region
      _
    $region13: #{tpu_custom_call.1} parent=1 // pred_fallthru
      _
    // Predicated region
    $region14: #{tpu_custom_call.1} parent=1 // pred_check
      _
    $region15: #{tpu_custom_call.1} parent=1 // pred_check_branch
      %22 = sbr.rel (0) target = $region17
    $region16: #{tpu_custom_call.1} parent=1 // pred_region
      %s24 = ssub.s32 1024, 1024
      %25 = vsyncadd [#allocation3], %s24
      %s26 = sshll.u32 [#allocation2], 4
      %s27 = int_to_ptr.vmem [resolvable:$true] %s26
      %32 = dma.hbm_to_vmem [thread:$0]  %s3, 1024, %s27, [#allocation3], 64, 64, 4
    $region17: #{tpu_custom_call.1} parent=1 // pred_fallthru
      _
    // Predicated region
    $region18: #{tpu_custom_call.1} parent=1 // pred_check
      _
    $region19: #{tpu_custom_call.1} parent=1 // pred_check_branch
      %34 = sbr.rel (0) target = $region21
    $region20: #{tpu_custom_call.1} parent=1 // pred_region
      _
    $region21: #{tpu_custom_call.1} parent=1 // pred_fallthru
      _
    // Predicated region
    $region22: #{tpu_custom_call.1} parent=1 // pred_check
      _
    $region23: #{tpu_custom_call.1} parent=1 // pred_check_branch
      %36 = sbr.rel (0) target = $region25
    $region24: #{tpu_custom_call.1} parent=1 // pred_region
      %s38 = ssub.s32 1024, 1024
      %39 = vsyncadd [#allocation6], %s38
      %s40 = sshll.u32 [#allocation5], 4
      %s41 = int_to_ptr.vmem [resolvable:$true] %s40
      %46 = dma.hbm_to_vmem [thread:$0]  %s5, 1024, %s41, [#allocation6], 64, 64, 4
    $region25: #{tpu_custom_call.1} parent=1 // pred_fallthru
      _
    // Predicated region
    $region26: #{tpu_custom_call.1} parent=1 // pred_check
      _
    $region27: #{tpu_custom_call.1} parent=1 // pred_check_branch
      %48 = sbr.rel (0) target = $region29
    $region28: #{tpu_custom_call.1} parent=1 // pred_region
      _
    $region29: #{tpu_custom_call.1} parent=1 // pred_fallthru
      _
    // Predicated region
    $region30: #{tpu_custom_call.1} parent=1 // pred_check
      _
    $region31: #{tpu_custom_call.1} parent=1 // pred_check_branch
      %50 = sbr.rel (0) target = $region33
    $region32: #{tpu_custom_call.1} parent=1 // pred_region
      %51 = dma.done [#allocation3], 1024
    $region33: #{tpu_custom_call.1} parent=1 // pred_fallthru
      _
    // Predicated region
    $region34: #{tpu_custom_call.1} parent=1 // pred_check
      _
    $region35: #{tpu_custom_call.1} parent=1 // pred_check_branch
      %53 = sbr.rel (0) target = $region37
    $region36: #{tpu_custom_call.1} parent=1 // pred_region
      %54 = dma.done [#allocation6], 1024
    $region37: #{tpu_custom_call.1} parent=1 // pred_fallthru
      _
    %v56 = vld [vmem:[%s0] sm:$0xff]
    %v57 = vld [vmem:[%s1] sm:$0x3]
    %59 = vset.pattern.permute.xlu0 0
    %60 = vperm.xlu0 %59, %v56
    %v61 = vpop.permute.xlu0 %60
    %v63 = vlaneseq
    %v64 = vshrl.u32 %v63, 7
    %v65 = vsub.s32 0, %v64
    %v66 = vrot.slane %v57, %v65
    %v67 = vmul.f32 %v61, %v66
    %68 = vset.pattern.permute.xlu0 1
    %69 = vperm.xlu0 %68, %v56
    %v70 = vpop.permute.xlu0 %69
    %v72 = vlaneseq
    %v73 = vshrl.u32 %v72, 7
    %v74 = vsub.s32 1, %v73
    %v75 = vrot.slane %v57, %v74
    %v76 = vmul.f32 %v70, %v75
    %v77 = vadd.f32 %v67, %v76
    %v78 = vld [vmem:[%s2] sm:$0x1]
    %v80 = vlaneseq
    %v81 = vshrl.u32 %v80, 7
    %v82 = vsub.s32 0, %v81
    %v83 = vrot.slane %v78, %v82
    %v85 = vadd.f32 %v77, %v83
    %v86 = vmax.f32 %v85, 0.0
    %v87 = vpack.c.bf16 %v86, %v86
    %v88 = vld [vmem:[#allocation2] sm:$0xf]
    %v89 = vld [vmem:[#allocation2 + $0x4] sm:$0xf]
    %v90 = vld [vmem:[#allocation2 + $0x8] sm:$0xf]
    %v91 = vld [vmem:[#allocation2 + $0xc] sm:$0xf]
    %v92 = vld [vmem:[#allocation2 + $0x10] sm:$0xf]
    %v93 = vld [vmem:[#allocation2 + $0x14] sm:$0xf]
    %v94 = vld [vmem:[#allocation2 + $0x18] sm:$0xf]
    %v95 = vld [vmem:[#allocation2 + $0x1c] sm:$0xf]
    %v96 = vld [vmem:[#allocation2 + $0x20] sm:$0xf]
    %v97 = vld [vmem:[#allocation2 + $0x24] sm:$0xf]
    %v98 = vld [vmem:[#allocation2 + $0x28] sm:$0xf]
    %v99 = vld [vmem:[#allocation2 + $0x2c] sm:$0xf]
    %v100 = vld [vmem:[#allocation2 + $0x30] sm:$0xf]
    %v101 = vld [vmem:[#allocation2 + $0x34] sm:$0xf]
    %v102 = vld [vmem:[#allocation2 + $0x38] sm:$0xf]
    %v103 = vld [vmem:[#allocation2 + $0x3c] sm:$0xf]
    %v104 = vld [vmem:[%s4] sm:$0x1]
    %v106 = vlaneseq
    %v107 = vshrl.u32 %v106, 7
    %v108 = vsub.s32 0, %v107
    %v109 = vrot.slane %v104, %v108
    %v127 = vunpack.c.l.b16 %v88
    %v128 = vunpack.c.l.b16 %v89
    %v129 = vunpack.c.l.b16 %v90
    %v130 = vunpack.c.l.b16 %v91
    %v131 = vunpack.c.l.b16 %v92
    %v132 = vunpack.c.l.b16 %v93
    %v133 = vunpack.c.l.b16 %v94
    %v134 = vunpack.c.l.b16 %v95
    %v135 = vunpack.c.l.b16 %v96
    %v136 = vunpack.c.l.b16 %v97
    %v137 = vunpack.c.l.b16 %v98
    %v138 = vunpack.c.l.b16 %v99
    %v139 = vunpack.c.l.b16 %v100
    %v140 = vunpack.c.l.b16 %v101
    %v141 = vunpack.c.l.b16 %v102
    %v142 = vunpack.c.l.b16 %v103
    %v143 = vpack.c.b16 %v128, %v127
    %v144 = vpack.c.b16 %v130, %v129
    %v145 = vpack.c.b16 %v132, %v131
    %v146 = vpack.c.b16 %v134, %v133
    %v147 = vpack.c.b16 %v136, %v135
    %v148 = vpack.c.b16 %v138, %v137
    %v149 = vpack.c.b16 %v140, %v139
    %v150 = vpack.c.b16 %v142, %v141
    %159 = vmatprep.subr.bf16.mxu0 0
    %160 = vmatpush1.bf16.msra.mxu0 %v143
    %161 = vmatprep.subr.bf16.mxu0 0
    %162 = vmatpush1.bf16.msra.mxu0 %v144
    %163 = vmatprep.subr.bf16.mxu0 0
    %164 = vmatpush1.bf16.msra.mxu0 %v145
    %165 = vmatprep.subr.bf16.mxu0 0
    %166 = vmatpush1.bf16.msra.mxu0 %v146
    %167 = vmatprep.subr.bf16.mxu0 0
    %168 = vmatpush1.bf16.msra.mxu0 %v147
    %169 = vmatprep.subr.bf16.mxu0 0
    %170 = vmatpush1.bf16.msra.mxu0 %v148
    %171 = vmatprep.subr.bf16.mxu0 0
    %172 = vmatpush1.bf16.msra.mxu0 %v149
    %173 = vmatprep.subr.bf16.mxu0 0
    %174 = vmatpush1.bf16.msra.mxu0 %v150
    %175 = vmatprep.subr.bf16.mxu0 0
    %176 = vmatpush1.bf16.msra.mxu0 0
    %177 = vmatprep.subr.bf16.mxu0 0
    %178 = vmatpush1.bf16.msra.mxu0 0
    %179 = vmatprep.subr.bf16.mxu0 0
    %180 = vmatpush1.bf16.msra.mxu0 0
    %181 = vmatprep.subr.bf16.mxu0 0
    %182 = vmatpush1.bf16.msra.mxu0 0
    %183 = vmatprep.subr.bf16.mxu0 0
    %184 = vmatpush1.bf16.msra.mxu0 0
    %185 = vmatprep.subr.bf16.mxu0 0
    %186 = vmatpush1.bf16.msra.mxu0 0
    %187 = vmatprep.subr.bf16.mxu0 0
    %188 = vmatpush1.bf16.msra.mxu0 0
    %189 = vmatprep.subr.bf16.mxu0 0
    %190 = vmatpush1.bf16.msra.mxu0 0
    %191 = vmatprep.mubr.bf16.mxu0 0
    %192 = vmatmul.mubr.bf16.gmra.mrb[0].mxu0 %v87
    %v193 = vpop.f32.mrb[0].mxu0
    %v194 = vadd.f32 %v109, %v193
    %v195 = vpop.f32.mrb[0].mxu0
    %v196 = vpop.f32.mrb[0].mxu0
    %v197 = vpop.f32.mrb[0].mxu0
    %198 = vdwg.mxu0
    %v199 = vmax.f32 %v194, 0.0
    %v200 = vpack.c.bf16 %v199, %v199
    %v201 = vld [vmem:[#allocation5] sm:$0xf]
    %v202 = vld [vmem:[#allocation5 + $0x4] sm:$0xf]
    %v203 = vld [vmem:[#allocation5 + $0x8] sm:$0xf]
    %v204 = vld [vmem:[#allocation5 + $0xc] sm:$0xf]
    %v205 = vld [vmem:[#allocation5 + $0x10] sm:$0xf]
    %v206 = vld [vmem:[#allocation5 + $0x14] sm:$0xf]
    %v207 = vld [vmem:[#allocation5 + $0x18] sm:$0xf]
    %v208 = vld [vmem:[#allocation5 + $0x1c] sm:$0xf]
    %v209 = vld [vmem:[#allocation5 + $0x20] sm:$0xf]
    %v210 = vld [vmem:[#allocation5 + $0x24] sm:$0xf]
    %v211 = vld [vmem:[#allocation5 + $0x28] sm:$0xf]
    %v212 = vld [vmem:[#allocation5 + $0x2c] sm:$0xf]
    %v213 = vld [vmem:[#allocation5 + $0x30] sm:$0xf]
    %v214 = vld [vmem:[#allocation5 + $0x34] sm:$0xf]
    %v215 = vld [vmem:[#allocation5 + $0x38] sm:$0xf]
    %v216 = vld [vmem:[#allocation5 + $0x3c] sm:$0xf]
    %v217 = vld [vmem:[%s6] sm:$0x1]
    %v219 = vlaneseq
    %v220 = vshrl.u32 %v219, 7
    %v221 = vsub.s32 0, %v220
    %v222 = vrot.slane %v217, %v221
    %v240 = vunpack.c.l.b16 %v201
    %v241 = vunpack.c.l.b16 %v202
    %v242 = vunpack.c.l.b16 %v203
    %v243 = vunpack.c.l.b16 %v204
    %v244 = vunpack.c.l.b16 %v205
    %v245 = vunpack.c.l.b16 %v206
    %v246 = vunpack.c.l.b16 %v207
    %v247 = vunpack.c.l.b16 %v208
    %v248 = vunpack.c.l.b16 %v209
    %v249 = vunpack.c.l.b16 %v210
    %v250 = vunpack.c.l.b16 %v211
    %v251 = vunpack.c.l.b16 %v212
    %v252 = vunpack.c.l.b16 %v213
    %v253 = vunpack.c.l.b16 %v214
    %v254 = vunpack.c.l.b16 %v215
    %v255 = vunpack.c.l.b16 %v216
    %v256 = vpack.c.b16 %v241, %v240
    %v257 = vpack.c.b16 %v243, %v242
    %v258 = vpack.c.b16 %v245, %v244
    %v259 = vpack.c.b16 %v247, %v246
    %v260 = vpack.c.b16 %v249, %v248
    %v261 = vpack.c.b16 %v251, %v250
    %v262 = vpack.c.b16 %v253, %v252
    %v263 = vpack.c.b16 %v255, %v254
    %272 = vmatprep.subr.bf16.mxu0 0
    %273 = vmatpush1.bf16.msra.mxu0 %v256
    %274 = vmatprep.subr.bf16.mxu0 0
    %275 = vmatpush1.bf16.msra.mxu0 %v257
    %276 = vmatprep.subr.bf16.mxu0 0
    %277 = vmatpush1.bf16.msra.mxu0 %v258
    %278 = vmatprep.subr.bf16.mxu0 0
    %279 = vmatpush1.bf16.msra.mxu0 %v259
    %280 = vmatprep.subr.bf16.mxu0 0
    %281 = vmatpush1.bf16.msra.mxu0 %v260
    %282 = vmatprep.subr.bf16.mxu0 0
    %283 = vmatpush1.bf16.msra.mxu0 %v261
    %284 = vmatprep.subr.bf16.mxu0 0
    %285 = vmatpush1.bf16.msra.mxu0 %v262
    %286 = vmatprep.subr.bf16.mxu0 0
    %287 = vmatpush1.bf16.msra.mxu0 %v263
    %288 = vmatprep.subr.bf16.mxu0 0
    %289 = vmatpush1.bf16.msra.mxu0 0
    %290 = vmatprep.subr.bf16.mxu0 0
    %291 = vmatpush1.bf16.msra.mxu0 0
    %292 = vmatprep.subr.bf16.mxu0 0
    %293 = vmatpush1.bf16.msra.mxu0 0
    %294 = vmatprep.subr.bf16.mxu0 0
    %295 = vmatpush1.bf16.msra.mxu0 0
    %296 = vmatprep.subr.bf16.mxu0 0
    %297 = vmatpush1.bf16.msra.mxu0 0
    %298 = vmatprep.subr.bf16.mxu0 0
    %299 = vmatpush1.bf16.msra.mxu0 0
    %300 = vmatprep.subr.bf16.mxu0 0
    %301 = vmatpush1.bf16.msra.mxu0 0
    %302 = vmatprep.subr.bf16.mxu0 0
    %303 = vmatpush1.bf16.msra.mxu0 0
    %304 = vmatprep.mubr.bf16.mxu0 0
    %305 = vmatmul.mubr.bf16.gmra.mrb[0].mxu0 %v200
    %v306 = vpop.f32.mrb[0].mxu0
    %v307 = vadd.f32 %v222, %v306
    %v308 = vpop.f32.mrb[0].mxu0
    %v309 = vpop.f32.mrb[0].mxu0
    %v310 = vpop.f32.mrb[0].mxu0
    %311 = vdwg.mxu0
    %312 = vst [vmem:[#allocation7] sm:$0xff] %v307
    // Predicated region
    $region38: #{tpu_custom_call.1} parent=1 // pred_check
      _
    $region39: #{tpu_custom_call.1} parent=1 // pred_check_branch
      %314 = sbr.rel (0) target = $region41
    $region40: #{tpu_custom_call.1} parent=1 // pred_region
      %s316 = ssub.s32 128, 128
      %317 = vsyncadd [#allocation4], %s316
      %s319 = sshll.u32 [#allocation7], 4
      %s320 = int_to_ptr.vmem [resolvable:$true] %s319
      %322 = dma.vmem_to_hbm [thread:$0]  %s320, 128, %s7, [#allocation4]
    $region41: #{tpu_custom_call.1} parent=1 // pred_fallthru
      _
    // Predicated region
    $region42: #{tpu_custom_call.1} parent=1 // pred_check
      _
    $region43: #{tpu_custom_call.1} parent=1 // pred_check_branch
      %324 = sbr.rel (0) target = $region45
    $region44: #{tpu_custom_call.1} parent=1 // pred_region
      %325 = dma.done [#allocation4], 128
    $region45: #{tpu_custom_call.1} parent=1 // pred_fallthru
      _
    %326 = vsyncpa [#allocation3], 1
    %327 = vsyncpa [#allocation6], 1
    %328 = vsyncpa [#allocation4], 1

</llo_original>
